<compile_context>
chip_gen: v6e
topology: v6e:2x2x1
jax: 0.10.0
libtpu: 0.0.40
codegen_flags: <defaults>
</compile_context>

<pallas_src>
import functools

import jax
import jax.numpy as jnp
import numpy as np
from jax import lax
from jax.experimental import pallas as pl
from jax.experimental.pallas import tpu as pltpu

# int32 mixing constants (second one wrapped to two's-complement int32).
_MIX1 = int(np.asarray(0x7FEB352D, dtype=np.uint32).view(np.int32))
_MIX2 = int(np.asarray(0x846CA68B, dtype=np.uint32).view(np.int32))


def _round_up(x, m):
    return (x + m - 1) // m * m


def _vq_kernel(seed_ref, x_ref, w1_ref, b1_ref, w2_ref, b2_ref, cb_ref,
               logits_ref, codes_ref, *, tile_m, use_noise):
    # --- MLP: hiddens = relu(x @ W1 + b1); logits = hiddens @ W2 + b2 -------
    x = x_ref[...].astype(w1_ref.dtype)                              # cast tile in-kernel
    h = jnp.dot(x, w1_ref[...], preferred_element_type=jnp.float32) + b1_ref[...]
    h = jnp.maximum(h, 0.0)                                          # ReLU (f32)
    logits = jnp.dot(h.astype(w2_ref.dtype), w2_ref[...],
                     preferred_element_type=jnp.float32) + b2_ref[...]
    logits_ref[...] = logits.astype(logits_ref.dtype)                # (TM, C)

    c = logits.shape[-1]
    col = lax.broadcasted_iota(jnp.int32, logits.shape, 1)

    # --- Gumbel noise via in-kernel integer hash (training only, static) ----
    if use_noise:
        row = lax.broadcasted_iota(jnp.int32, logits.shape, 0) + pl.program_id(0) * tile_m
        v = (row * c + col) ^ seed_ref[0]
        # lowbias32-style avalanche (arithmetic shifts + wrapping int32 muls)
        v = v ^ (v >> 16)
        v = v * _MIX1
        v = v ^ (v >> 15)
        v = v * _MIX2
        v = v ^ (v >> 16)
        mant = (v >> 9) & 0x007FFFFF                                 # 23 random bits
        u = mant.astype(jnp.float32) * (1.0 / 8388608.0)             # uniform [0, 1)
        eps = 1e-20
        g = -jnp.log(-jnp.log(u + eps) + eps)                        # Gumbel(0, 1)
        perturbed = logits + g          # no /T: argmax is scale-invariant
    else:
        perturbed = logits

    # --- hard one-hot of the first maximal index (ST gumbel-softmax fwd) ----
    row_max = jnp.max(perturbed, axis=-1, keepdims=True)
    first_idx = jnp.min(jnp.where(perturbed == row_max, col, c),
                        axis=-1, keepdims=True)
    onehot = jnp.where(col == first_idx, 1.0, 0.0).astype(cb_ref.dtype)

    # --- codebook lookup: codes = onehot @ codebook --------------------------
    codes_ref[...] = jnp.dot(
        onehot, cb_ref[...], preferred_element_type=jnp.float32
    ).astype(codes_ref.dtype)


def vq_layer_forward(inputs_BxLxI, params, *, gumbel_temperature, testing, key,
                     tile_m=256, use_bf16=True, out_dtype=jnp.bfloat16):
    """VQLayer forward. Returns (logits_BxLxC, codes_BxLxE) in `out_dtype`."""
    del gumbel_temperature  # forward hard one-hot is temperature-invariant
    w1, b1, w2, b2, codebook = params
    B, L, I = inputs_BxLxI.shape
    H = w1.shape[1]
    C = w2.shape[1]
    E = codebook.shape[1]
    N = B * L

    cdt = jnp.bfloat16 if use_bf16 else jnp.float32   # MXU input dtype

    x = inputs_BxLxI.reshape(N, I)                    # no pad / no extra cast
    w1c = w1.astype(cdt)
    w2c = w2.astype(cdt)
    cbc = codebook.astype(cdt)
    b1r = b1.astype(jnp.float32).reshape(1, H)
    b2r = b2.astype(jnp.float32).reshape(1, C)

    tm = _round_up(min(tile_m, N), 8)                 # sublane-aligned row tile
    grid = (pl.cdiv(N, tm),)                          # remainder handled by pipeline

    if testing:
        seed = jnp.zeros((1,), jnp.int32)
        use_noise = False
    else:
        seed = jax.random.randint(key, (1,), 0, jnp.iinfo(jnp.int32).max,
                                  dtype=jnp.int32)
        use_noise = True

    kernel = functools.partial(_vq_kernel, tile_m=tm, use_noise=use_noise)

    out_isz = jnp.dtype(out_dtype).itemsize
    w_isz = jnp.dtype(cdt).itemsize
    cost = pl.CostEstimate(
        flops=int(2 * N * (I * H + H * C + C * E)),
        transcendentals=int(2 * N * C) if use_noise else 0,
        bytes_accessed=int(N * I * x.dtype.itemsize
                           + (I * H + H * C + C * E) * w_isz
                           + (H + C) * 4
                           + N * (C + E) * out_isz),
    )

    const_spec = lambda shape: pl.BlockSpec(shape, lambda i, s: (0, 0),
                                            pipeline_mode=pl.Buffered(1))

    logits, codes = pl.pallas_call(
        kernel,
        out_shape=(
            jax.ShapeDtypeStruct((N, C), out_dtype),
            jax.ShapeDtypeStruct((N, E), out_dtype),
        ),
        grid_spec=pltpu.PrefetchScalarGridSpec(
            num_scalar_prefetch=1,                      # seed -> SMEM
            grid=grid,
            in_specs=[
                pl.BlockSpec((tm, I), lambda i, s: (i, 0)),   # x rows (f32, cast in-kernel)
                const_spec((I, H)),                           # W1
                const_spec((1, H)),                           # b1
                const_spec((H, C)),                           # W2
                const_spec((1, C)),                           # b2
                const_spec((C, E)),                           # codebook
            ],
            out_specs=[
                pl.BlockSpec((tm, C), lambda i, s: (i, 0)),   # logits
                pl.BlockSpec((tm, E), lambda i, s: (i, 0)),   # codes
            ],
        ),
        compiler_params=pltpu.CompilerParams(
            dimension_semantics=("parallel",),
        ),
        cost_estimate=cost,
    )(seed, x, w1c, b1r, w2c, b2r, cbc)

    return logits.reshape(B, L, C), codes.reshape(B, L, E)


def init_params(key, input_size, hidden_size, codebook_size, code_dim):
    """Deterministic synthetic parameters (shapes match the nn.Module)."""
    k1, k2, k3, k4, k5 = jax.random.split(key, 5)
    # stored pre-transposed for (rows, in) @ (in, out) matmuls
    w1 = jax.random.normal(k1, (input_size, hidden_size), jnp.float32) * 0.1
    b1 = jax.random.normal(k2, (hidden_size,), jnp.float32) * 0.01
    w2 = jax.random.normal(k3, (hidden_size, codebook_size), jnp.float32) * 0.1
    b2 = jax.random.normal(k4, (codebook_size,), jnp.float32) * 0.01
    codebook = jax.random.normal(k5, (codebook_size, code_dim), jnp.float32) * 0.1
    return w1, b1, w2, b2, codebook


if __name__ == "__main__":
    B, L = 2, 8
    input_size, hidden_size = 32, 16
    codebook_size, code_dim = 16, 32
    gumbel_temperature = 0.5

    root = jax.random.PRNGKey(0)
    k_params, k_inputs, k_gumbel = jax.random.split(root, 3)

    params = init_params(k_params, input_size, hidden_size, codebook_size, code_dim)
    inputs = jax.random.normal(k_inputs, (B, L, input_size), jnp.float32)

    # training-mode forward: in-kernel hashed Gumbel noise, bf16 MXU, bf16 outputs
    logits, codes = vq_layer_forward(
        inputs, params, gumbel_temperature=gumbel_temperature,
        testing=False, key=k_gumbel)
    jax.block_until_ready((logits, codes))
    assert logits.shape == (B, L, codebook_size)
    assert codes.shape == (B, L, code_dim)
    assert bool(jnp.all(jnp.isfinite(logits.astype(jnp.float32))))
    assert bool(jnp.all(jnp.isfinite(codes.astype(jnp.float32))))

    # testing-mode forward (plain argmax), f32 MXU + f32 outputs, checked vs jnp ref
    logits_t, codes_t = vq_layer_forward(
        inputs, params, gumbel_temperature=gumbel_temperature,
        testing=True, key=k_gumbel, use_bf16=False, out_dtype=jnp.float32)
    jax.block_until_ready((logits_t, codes_t))

    w1, b1, w2, b2, codebook = params
    x2 = inputs.reshape(-1, input_size)
    logits_ref = jnp.maximum(x2 @ w1 + b1, 0.0) @ w2 + b2
    np.testing.assert_allclose(
        np.asarray(logits_t.reshape(-1, codebook_size)),
        np.asarray(logits_ref), atol=2e-2, rtol=2e-2)
    idx = jnp.argmax(logits_t.reshape(-1, codebook_size), axis=-1)
    np.testing.assert_allclose(
        np.asarray(codes_t.reshape(-1, code_dim)),
        np.asarray(codebook[idx]), atol=1e-2, rtol=1e-2)

    # TODO(synk): straight-through (soft-softmax) gradient path is not
    # implemented — this kernel covers the forward pass only.
    print("KERNEL_OK")
</pallas_src>

<mosaic_0001>
module attributes {stable_mosaic.version = 11 : i64} {
  func.func @_vq_kernel(%arg0: i32, %arg1: memref<1xi32, #tpu.memory_space<smem>>, %arg2: memref<16x32xf32, #tpu.memory_space<vmem>>, %arg3: memref<32x16xbf16, #tpu.memory_space<vmem>>, %arg4: memref<1x16xf32, #tpu.memory_space<vmem>>, %arg5: memref<16x16xbf16, #tpu.memory_space<vmem>>, %arg6: memref<1x16xf32, #tpu.memory_space<vmem>>, %arg7: memref<16x32xbf16, #tpu.memory_space<vmem>>, %arg8: memref<16x16xbf16, #tpu.memory_space<vmem>>, %arg9: memref<16x32xbf16, #tpu.memory_space<vmem>>) attributes {dimension_semantics = [#tpu.dimension_semantics<parallel>], iteration_bounds = array<i64: 1>, scalar_prefetch = 1 : i64, scratch_operands = 0 : i64, tpu.core_type = #tpu.core_type<tc>, window_params = [{transform_indices = @transform_0, window_bounds = array<i64: 16, 32>}, {pipeline_mode = #tpu.pipeline_mode<synchronous>, transform_indices = @transform_1, window_bounds = array<i64: 32, 16>}, {pipeline_mode = #tpu.pipeline_mode<synchronous>, transform_indices = @transform_2, window_bounds = array<i64: 1, 16>}, {pipeline_mode = #tpu.pipeline_mode<synchronous>, transform_indices = @transform_3, window_bounds = array<i64: 16, 16>}, {pipeline_mode = #tpu.pipeline_mode<synchronous>, transform_indices = @transform_4, window_bounds = array<i64: 1, 16>}, {pipeline_mode = #tpu.pipeline_mode<synchronous>, transform_indices = @transform_5, window_bounds = array<i64: 16, 32>}, {transform_indices = @transform_6, window_bounds = array<i64: 16, 16>}, {transform_indices = @transform_7, window_bounds = array<i64: 16, 32>}]} {
    %c0 = arith.constant 0 : index
    %c0_0 = arith.constant 0 : index
    %0 = vector.load %arg2[%c0, %c0_0] : memref<16x32xf32, #tpu.memory_space<vmem>>, vector<16x32xf32>
    %1 = arith.truncf %0 : vector<16x32xf32> to vector<16x32xbf16>
    %c0_1 = arith.constant 0 : index
    %c0_2 = arith.constant 0 : index
    %2 = vector.load %arg3[%c0_1, %c0_2] : memref<32x16xbf16, #tpu.memory_space<vmem>>, vector<32x16xbf16>
    %cst = arith.constant dense<0.000000e+00> : vector<16x16xf32>
    %3 = tpu.matmul %1, %2, %cst {dimension_numbers = #tpu.dot_dimension_numbers<[1], [0], [0], [1], [0, 0, 1, 1], [], []>} : vector<16x32xbf16>, vector<32x16xbf16>, vector<16x16xf32> -> vector<16x16xf32>
    %c0_3 = arith.constant 0 : index
    %c0_4 = arith.constant 0 : index
    %4 = vector.load %arg4[%c0_3, %c0_4] : memref<1x16xf32, #tpu.memory_space<vmem>>, vector<1x16xf32>
    %5 = vector.broadcast %4 : vector<1x16xf32> to vector<16x16xf32>
    %6 = arith.addf %3, %5 : vector<16x16xf32>
    %cst_5 = arith.constant 0.000000e+00 : f32
    %7 = vector.broadcast %cst_5 : f32 to vector<16x16xf32>
    %8 = arith.maximumf %6, %7 : vector<16x16xf32>
    %9 = arith.truncf %8 : vector<16x16xf32> to vector<16x16xbf16>
    %c0_6 = arith.constant 0 : index
    %c0_7 = arith.constant 0 : index
    %10 = vector.load %arg5[%c0_6, %c0_7] : memref<16x16xbf16, #tpu.memory_space<vmem>>, vector<16x16xbf16>
    %cst_8 = arith.constant dense<0.000000e+00> : vector<16x16xf32>
    %11 = tpu.matmul %9, %10, %cst_8 {dimension_numbers = #tpu.dot_dimension_numbers<[1], [0], [0], [1], [0, 0, 1, 1], [], []>} : vector<16x16xbf16>, vector<16x16xbf16>, vector<16x16xf32> -> vector<16x16xf32>
    %c0_9 = arith.constant 0 : index
    %c0_10 = arith.constant 0 : index
    %12 = vector.load %arg6[%c0_9, %c0_10] : memref<1x16xf32, #tpu.memory_space<vmem>>, vector<1x16xf32>
    %13 = vector.broadcast %12 : vector<1x16xf32> to vector<16x16xf32>
    %14 = arith.addf %11, %13 : vector<16x16xf32>
    %15 = arith.truncf %14 : vector<16x16xf32> to vector<16x16xbf16>
    %c0_11 = arith.constant 0 : index
    %c0_12 = arith.constant 0 : index
    %16 = vector.load %arg8[%c0_11, %c0_12] : memref<16x16xbf16, #tpu.memory_space<vmem>>, vector<16x16xbf16>
    tpu.vector_store %arg8[%c0_11, %c0_12], %15 {strides = array<i32>} : memref<16x16xbf16, #tpu.memory_space<vmem>>, vector<16x16xbf16>,
    %17 = tpu.iota {dimensions = array<i32: 1>} : vector<16x16xi32>
    %18 = tpu.iota {dimensions = array<i32: 0>} : vector<16x16xi32>
    %c16_i32 = arith.constant 16 : i32
    %19 = arith.muli %arg0, %c16_i32 : i32
    %20 = vector.broadcast %19 : i32 to vector<16x16xi32>
    %21 = arith.addi %18, %20 : vector<16x16xi32>
    %c16_i32_13 = arith.constant 16 : i32
    %22 = vector.broadcast %c16_i32_13 : i32 to vector<16x16xi32>
    %23 = arith.muli %21, %22 : vector<16x16xi32>
    %24 = arith.addi %23, %17 : vector<16x16xi32>
    %c0_14 = arith.constant 0 : index
    %25 = memref.load %arg1[%c0_14] : memref<1xi32, #tpu.memory_space<smem>>
    %26 = vector.broadcast %25 : i32 to vector<16x16xi32>
    %27 = arith.xori %24, %26 : vector<16x16xi32>
    %c16_i32_15 = arith.constant 16 : i32
    %28 = vector.broadcast %c16_i32_15 : i32 to vector<16x16xi32>
    %29 = arith.shrsi %27, %28 : vector<16x16xi32>
    %30 = arith.xori %27, %29 : vector<16x16xi32>
    %c2146121005_i32 = arith.constant 2146121005 : i32
    %31 = vector.broadcast %c2146121005_i32 : i32 to vector<16x16xi32>
    %32 = arith.muli %30, %31 : vector<16x16xi32>
    %c15_i32 = arith.constant 15 : i32
    %33 = vector.broadcast %c15_i32 : i32 to vector<16x16xi32>
    %34 = arith.shrsi %32, %33 : vector<16x16xi32>
    %35 = arith.xori %32, %34 : vector<16x16xi32>
    %c-2073254261_i32 = arith.constant -2073254261 : i32
    %36 = vector.broadcast %c-2073254261_i32 : i32 to vector<16x16xi32>
    %37 = arith.muli %35, %36 : vector<16x16xi32>
    %c16_i32_16 = arith.constant 16 : i32
    %38 = vector.broadcast %c16_i32_16 : i32 to vector<16x16xi32>
    %39 = arith.shrsi %37, %38 : vector<16x16xi32>
    %40 = arith.xori %37, %39 : vector<16x16xi32>
    %c9_i32 = arith.constant 9 : i32
    %41 = vector.broadcast %c9_i32 : i32 to vector<16x16xi32>
    %42 = arith.shrsi %40, %41 : vector<16x16xi32>
    %c8388607_i32 = arith.constant 8388607 : i32
    %43 = vector.broadcast %c8388607_i32 : i32 to vector<16x16xi32>
    %44 = arith.andi %42, %43 : vector<16x16xi32>
    %45 = arith.sitofp %44 : vector<16x16xi32> to vector<16x16xf32>
    %cst_17 = arith.constant 1.1920929E-7 : f32
    %46 = vector.broadcast %cst_17 : f32 to vector<16x16xf32>
    %47 = arith.mulf %45, %46 : vector<16x16xf32>
    %cst_18 = arith.constant 9.99999968E-21 : f32
    %48 = vector.broadcast %cst_18 : f32 to vector<16x16xf32>
    %49 = arith.addf %47, %48 : vector<16x16xf32>
    %50 = math.log %49 : vector<16x16xf32>
    %cst_19 = arith.constant 0.000000e+00 : f32
    %51 = vector.broadcast %cst_19 : f32 to vector<16x16xf32>
    %52 = arith.subf %51, %50 : vector<16x16xf32>
    %cst_20 = arith.constant 9.99999968E-21 : f32
    %53 = vector.broadcast %cst_20 : f32 to vector<16x16xf32>
    %54 = arith.addf %52, %53 : vector<16x16xf32>
    %55 = math.log %54 : vector<16x16xf32>
    %cst_21 = arith.constant 0.000000e+00 : f32
    %56 = vector.broadcast %cst_21 : f32 to vector<16x16xf32>
    %57 = arith.subf %56, %55 : vector<16x16xf32>
    %58 = arith.addf %14, %57 : vector<16x16xf32>
    %cst_22 = arith.constant dense<0xFF800000> : vector<16xf32>
    %59 = vector.multi_reduction <maximumf>, %58, %cst_22 [1] : vector<16x16xf32> to vector<16xf32>
    %60 = vector.shape_cast %59 : vector<16xf32> to vector<16x1xf32>
    %61 = vector.broadcast %60 : vector<16x1xf32> to vector<16x16xf32>
    %62 = arith.cmpf oeq, %58, %61 : vector<16x16xf32>
    %c16_i32_23 = arith.constant 16 : i32
    %63 = vector.broadcast %c16_i32_23 : i32 to vector<16x16xi32>
    %64 = arith.select %62, %17, %63 : vector<16x16xi1>, vector<16x16xi32>
    %cst_24 = arith.constant dense<2147483647> : vector<16xi32>
    %65 = vector.multi_reduction <minsi>, %64, %cst_24 [1] : vector<16x16xi32> to vector<16xi32>
    %66 = vector.shape_cast %65 : vector<16xi32> to vector<16x1xi32>
    %67 = vector.broadcast %66 : vector<16x1xi32> to vector<16x16xi32>
    %68 = arith.cmpi eq, %17, %67 : vector<16x16xi32>
    %cst_25 = arith.constant 1.000000e+00 : f32
    %cst_26 = arith.constant 0.000000e+00 : f32
    %69 = vector.broadcast %cst_25 : f32 to vector<16x16xf32>
    %70 = vector.broadcast %cst_26 : f32 to vector<16x16xf32>
    %71 = arith.select %68, %69, %70 : vector<16x16xi1>, vector<16x16xf32>
    %72 = arith.truncf %71 : vector<16x16xf32> to vector<16x16xbf16>
    %c0_27 = arith.constant 0 : index
    %c0_28 = arith.constant 0 : index
    %73 = vector.load %arg7[%c0_27, %c0_28] : memref<16x32xbf16, #tpu.memory_space<vmem>>, vector<16x32xbf16>
    %cst_29 = arith.constant dense<0.000000e+00> : vector<16x32xf32>
    %74 = tpu.matmul %72, %73, %cst_29 {dimension_numbers = #tpu.dot_dimension_numbers<[1], [0], [0], [1], [0, 0, 1, 1], [], []>} : vector<16x16xbf16>, vector<16x32xbf16>, vector<16x32xf32> -> vector<16x32xf32>
    %75 = arith.truncf %74 : vector<16x32xf32> to vector<16x32xbf16>
    %c0_30 = arith.constant 0 : index
    %c0_31 = arith.constant 0 : index
    %76 = vector.load %arg9[%c0_30, %c0_31] : memref<16x32xbf16, #tpu.memory_space<vmem>>, vector<16x32xbf16>
    tpu.vector_store %arg9[%c0_30, %c0_31], %75 {strides = array<i32>} : memref<16x32xbf16, #tpu.memory_space<vmem>>, vector<16x32xbf16>,
    return
  }
  func.func @transform_0(%arg0: i32, %arg1: memref<1xi32, #tpu.memory_space<smem>>) -> (i32, i32) {
    %c0_i32 = arith.constant 0 : i32
    %c0_i32_0 = arith.constant 0 : i32
    return %arg0, %c0_i32 : i32, i32
  }
  func.func @transform_1(%arg0: i32, %arg1: memref<1xi32, #tpu.memory_space<smem>>) -> (i32, i32) {
    %c0_i32 = arith.constant 0 : i32
    %c0_i32_0 = arith.constant 0 : i32
    %c0_i32_1 = arith.constant 0 : i32
    return %c0_i32, %c0_i32_0 : i32, i32
  }
  func.func @transform_2(%arg0: i32, %arg1: memref<1xi32, #tpu.memory_space<smem>>) -> (i32, i32) {
    %c0_i32 = arith.constant 0 : i32
    %c0_i32_0 = arith.constant 0 : i32
    %c0_i32_1 = arith.constant 0 : i32
    return %c0_i32, %c0_i32_0 : i32, i32
  }
  func.func @transform_3(%arg0: i32, %arg1: memref<1xi32, #tpu.memory_space<smem>>) -> (i32, i32) {
    %c0_i32 = arith.constant 0 : i32
    %c0_i32_0 = arith.constant 0 : i32
    %c0_i32_1 = arith.constant 0 : i32
    return %c0_i32, %c0_i32_0 : i32, i32
  }
  func.func @transform_4(%arg0: i32, %arg1: memref<1xi32, #tpu.memory_space<smem>>) -> (i32, i32) {
    %c0_i32 = arith.constant 0 : i32
    %c0_i32_0 = arith.constant 0 : i32
    %c0_i32_1 = arith.constant 0 : i32
    return %c0_i32, %c0_i32_0 : i32, i32
  }
  func.func @transform_5(%arg0: i32, %arg1: memref<1xi32, #tpu.memory_space<smem>>) -> (i32, i32) {
    %c0_i32 = arith.constant 0 : i32
    %c0_i32_0 = arith.constant 0 : i32
    %c0_i32_1 = arith.constant 0 : i32
    return %c0_i32, %c0_i32_0 : i32, i32
  }
  func.func @transform_6(%arg0: i32, %arg1: memref<1xi32, #tpu.memory_space<smem>>) -> (i32, i32) {
    %c0_i32 = arith.constant 0 : i32
    %c0_i32_0 = arith.constant 0 : i32
    return %arg0, %c0_i32 : i32, i32
  }
  func.func @transform_7(%arg0: i32, %arg1: memref<1xi32, #tpu.memory_space<smem>>) -> (i32, i32) {
    %c0_i32 = arith.constant 0 : i32
    %c0_i32_0 = arith.constant 0 : i32
    return %arg0, %c0_i32 : i32, i32
  }
}

</mosaic_0001>

<llo_original>
// kernel: tpu_custom_call.1
$region0: #{tpu_custom_call.1}
  #allocation0 [shape = 'u32[]', space=smem, size = 0x4, offset = 0x4, fixed_abs, tag = 'smem constant byte address 0x4 - core index']
  #allocation1 [shape = 'u32[144,128]{1,0:T(1,128)}', space=vmem, size = 0x12000, scoped, tag = 'internal scratch']
  #allocation2 [shape = 's32[1]{0}', space=sflag, size = 0x4, scoped, tag = 'scoped memory for tpu_custom_call.1']
  #allocation3 [shape = 's32[1]{0:T(128)S(6)}', space=smem, size = 0x200, scoped, tag = 'prefetched SMEM operand 0']
  %s0 = inlined_call_operand.<no memory space> [shape: s32[1], index: 0, kind: input, shape index: {}]
  %s1 = inlined_call_operand.vmem [shape: f32[16,32], index: 1, kind: input, shape index: {}]
  %s2 = inlined_call_operand.vmem [shape: bf16[32,16], index: 2, kind: input, shape index: {}]
  %s3 = inlined_call_operand.vmem [shape: f32[1,16], index: 3, kind: input, shape index: {}]
  %s4 = inlined_call_operand.vmem [shape: bf16[16,16], index: 4, kind: input, shape index: {}]
  %s5 = inlined_call_operand.hbm [shape: f32[1,16], index: 5, kind: input, shape index: {}]
  %s6 = inlined_call_operand.vmem [shape: bf16[16,32], index: 6, kind: input, shape index: {}]
  %s7 = inlined_call_operand.hbm [shape: bf16[16,16], index: 7, kind: output, shape index: {0}]
  %s8 = inlined_call_operand.hbm [shape: bf16[16,32], index: 8, kind: output, shape index: {1}]
  %9 = xla_tuple %s7, %s8
  %s10 = sld [smem:[#allocation0]]
  $region46: #{tpu_custom_call.1} parent=0
    _
  %s12 = ssub.s32 1, %s10
  %s13 = scalar_select 0, %s12, %s10
  %14 = sst [smem:[#allocation3]] %s0
  $region1: #{tpu_custom_call.1} parent=0
    #allocation4 [shape = 'u8[512]{0}', space=vmem, size = 0x400, scoped, tag = 'input window, operand 5, single buffered']
    #allocation5 [shape = 's32[1]{0}', space=sflag, size = 0x4, scoped, tag = 'scoped memory for tpu_custom_call.1']
    #allocation6 [shape = 's32[1]{0}', space=sflag, size = 0x4, scoped, tag = 'scoped memory for tpu_custom_call.1']
    #allocation7 [shape = 'u8[4096]{0}', space=vmem, size = 0x1000, scoped, tag = 'output window, operand 0, single buffered']
    #allocation8 [shape = 'u8[4096]{0}', space=vmem, size = 0x1000, scoped, tag = 'output window, operand 1, single buffered']
    #allocation9 [shape = 's32[1]{0}', space=sflag, size = 0x4, scoped, tag = 'scoped memory for tpu_custom_call.1']
    %15 = vsyncpa [#allocation5], 0
    %16 = vsyncpa [#allocation6], 0
    %17 = vsyncpa [#allocation9], 0
    // Predicated region
    $region2: #{tpu_custom_call.1} parent=1 // pred_check
      _
    $region3: #{tpu_custom_call.1} parent=1 // pred_check_branch
      %19 = sbr.rel (0) target = $region5
    $region4: #{tpu_custom_call.1} parent=1 // pred_region
      _
    $region5: #{tpu_custom_call.1} parent=1 // pred_fallthru
      _
    // Predicated region
    $region6: #{tpu_custom_call.1} parent=1 // pred_check
      _
    $region7: #{tpu_custom_call.1} parent=1 // pred_check_branch
      %21 = sbr.rel (0) target = $region9
    $region8: #{tpu_custom_call.1} parent=1 // pred_region
      _
    $region9: #{tpu_custom_call.1} parent=1 // pred_fallthru
      _
    // Predicated region
    $region10: #{tpu_custom_call.1} parent=1 // pred_check
      _
    $region11: #{tpu_custom_call.1} parent=1 // pred_check_branch
      %23 = sbr.rel (0) target = $region13
    $region12: #{tpu_custom_call.1} parent=1 // pred_region
      _
    $region13: #{tpu_custom_call.1} parent=1 // pred_fallthru
      _
    // Predicated region
    $region14: #{tpu_custom_call.1} parent=1 // pred_check
      _
    $region15: #{tpu_custom_call.1} parent=1 // pred_check_branch
      %25 = sbr.rel (0) target = $region17
    $region16: #{tpu_custom_call.1} parent=1 // pred_region
      _
    $region17: #{tpu_custom_call.1} parent=1 // pred_fallthru
      _
    // Predicated region
    $region18: #{tpu_custom_call.1} parent=1 // pred_check
      _
    $region19: #{tpu_custom_call.1} parent=1 // pred_check_branch
      %27 = sbr.rel (0) target = $region21
    $region20: #{tpu_custom_call.1} parent=1 // pred_region
      %s29 = ssub.s32 16, 16
      %30 = vsyncadd [#allocation5], %s29
      %s32 = sshll.u32 [#allocation4], 4
      %s33 = int_to_ptr.vmem [resolvable:$true] %s32
      %35 = dma.hbm_to_vmem [thread:$0]  %s5, 16, %s33, [#allocation5]
    $region21: #{tpu_custom_call.1} parent=1 // pred_fallthru
      _
    // Predicated region
    $region22: #{tpu_custom_call.1} parent=1 // pred_check
      _
    $region23: #{tpu_custom_call.1} parent=1 // pred_check_branch
      %37 = sbr.rel (0) target = $region25
    $region24: #{tpu_custom_call.1} parent=1 // pred_region
      _
    $region25: #{tpu_custom_call.1} parent=1 // pred_fallthru
      _
    // Predicated region
    $region26: #{tpu_custom_call.1} parent=1 // pred_check
      _
    $region27: #{tpu_custom_call.1} parent=1 // pred_check_branch
      %39 = sbr.rel (0) target = $region29
    $region28: #{tpu_custom_call.1} parent=1 // pred_region
      %40 = dma.done [#allocation5], 16
    $region29: #{tpu_custom_call.1} parent=1 // pred_fallthru
      _
    %v42 = vld [vmem:[%s1] sm:$0xff]
    %v43 = vld [vmem:[%s1 + $0x8] sm:$0xff]
    %v44 = vpack.c.bf16 %v43, %v42
    %v45 = vld [vmem:[%s2] sm:$0xf]
    %v46 = vld [vmem:[%s2 + $0x4] sm:$0xf]
    %v47 = vld [vmem:[%s2 + $0x8] sm:$0xf]
    %v48 = vld [vmem:[%s2 + $0xc] sm:$0xf]
    %v49 = vld [vmem:[%s3] sm:$0x1]
    %v51 = vlaneseq
    %v52 = vshrl.u32 %v51, 7
    %v53 = vsub.s32 0, %v52
    %v54 = vrot.slane %v49, %v53
    %v60 = vunpack.c.l.b16 %v45
    %v61 = vunpack.c.l.b16 %v46
    %v62 = vunpack.c.l.b16 %v47
    %v63 = vunpack.c.l.b16 %v48
    %v64 = vpack.c.b16 %v61, %v60
    %v65 = vpack.c.b16 %v63, %v62
    %vm68 = vcmask 261120
    %v70 = vsel %vm68, %v44, 0
    %72 = vmatprep.subr.bf16.mxu0 0
    %73 = vmatpush1.bf16.msra.mxu0 0
    %74 = vmatprep.subr.bf16.mxu0 0
    %75 = vmatpush1.bf16.msra.mxu0 0
    %76 = vmatprep.subr.bf16.mxu0 0
    %77 = vmatpush1.bf16.msra.mxu0 0
    %78 = vmatprep.subr.bf16.mxu0 0
    %79 = vmatpush1.bf16.msra.mxu0 0
    %80 = vmatprep.subr.bf16.mxu0 0
    %81 = vmatpush1.bf16.msra.mxu0 0
    %82 = vmatprep.subr.bf16.mxu0 0
    %83 = vmatpush1.bf16.msra.mxu0 0
    %84 = vmatprep.subr.bf16.mxu0 0
    %85 = vmatpush1.bf16.msra.mxu0 %v65
    %86 = vmatprep.subr.bf16.mxu0 0
    %87 = vmatpush1.bf16.msra.mxu0 %v64
    %88 = vmatprep.subr.bf16.mxu0 0
    %89 = vmatpush2.bf16.msra.mxu0 0
    %90 = vmatprep.subr.bf16.mxu0 0
    %91 = vmatpush2.bf16.msra.mxu0 0
    %92 = vmatprep.subr.bf16.mxu0 0
    %93 = vmatpush2.bf16.msra.mxu0 0
    %94 = vmatprep.subr.bf16.mxu0 0
    %95 = vmatpush2.bf16.msra.mxu0 0
    %96 = vmatprep.subr.bf16.mxu0 0
    %97 = vmatpush2.bf16.msra.mxu0 0
    %98 = vmatprep.subr.bf16.mxu0 0
    %99 = vmatpush2.bf16.msra.mxu0 0
    %100 = vmatprep.subr.bf16.mxu0 0
    %101 = vmatpush2.bf16.msra.mxu0 0
    %102 = vmatprep.subr.bf16.mxu0 0
    %103 = vmatpush2.bf16.msra.mxu0 0
    %104 = vmatprep.mubr.bf16.mxu0 0
    %105 = vmatmul.mubr.bf16.gmra.mxu0 %v70
    %v106 = vpop.f32.mrf.mxu0
    %v107 = vadd.f32 %v54, %v106
    %v108 = vpop.f32.mrf.mxu0
    %v109 = vpop.f32.mrf.mxu0
    %v110 = vadd.f32 %v54, %v109
    %v111 = vpop.f32.mrf.mxu0
    %112 = vdwg.mxu0
    %v113 = vmax.f32 %v107, 0.0
    %v114 = vmax.f32 %v110, 0.0
    %v115 = vpack.c.bf16 %v114, %v113
    %v116 = vld [vmem:[%s4] sm:$0xf]
    %v117 = vld [vmem:[%s4 + $0x4] sm:$0xf]
    %v118 = vld [vmem:[#allocation4] sm:$0x1]
    %v120 = vlaneseq
    %v121 = vshrl.u32 %v120, 7
    %v122 = vsub.s32 0, %v121
    %v123 = vrot.slane %v118, %v122
    %v127 = vunpack.c.l.b16 %v116
    %v128 = vunpack.c.l.b16 %v117
    %v129 = vpack.c.b16 %v128, %v127
    %vm131 = vcmask 130048
    %v133 = vsel %vm131, %v115, 0
    %135 = vmatprep.subr.bf16.mxu0 0
    %136 = vmatpush1.bf16.msra.mxu0 0
    %137 = vmatprep.subr.bf16.mxu0 0
    %138 = vmatpush1.bf16.msra.mxu0 0
    %139 = vmatprep.subr.bf16.mxu0 0
    %140 = vmatpush1.bf16.msra.mxu0 0
    %141 = vmatprep.subr.bf16.mxu0 0
    %142 = vmatpush1.bf16.msra.mxu0 0
    %143 = vmatprep.subr.bf16.mxu0 0
    %144 = vmatpush1.bf16.msra.mxu0 0
    %145 = vmatprep.subr.bf16.mxu0 0
    %146 = vmatpush1.bf16.msra.mxu0 0
    %147 = vmatprep.subr.bf16.mxu0 0
    %148 = vmatpush1.bf16.msra.mxu0 0
    %149 = vmatprep.subr.bf16.mxu0 0
    %150 = vmatpush1.bf16.msra.mxu0 %v129
    %151 = vmatprep.subr.bf16.mxu0 0
    %152 = vmatpush2.bf16.msra.mxu0 0
    %153 = vmatprep.subr.bf16.mxu0 0
    %154 = vmatpush2.bf16.msra.mxu0 0
    %155 = vmatprep.subr.bf16.mxu0 0
    %156 = vmatpush2.bf16.msra.mxu0 0
    %157 = vmatprep.subr.bf16.mxu0 0
    %158 = vmatpush2.bf16.msra.mxu0 0
    %159 = vmatprep.subr.bf16.mxu0 0
    %160 = vmatpush2.bf16.msra.mxu0 0
    %161 = vmatprep.subr.bf16.mxu0 0
    %162 = vmatpush2.bf16.msra.mxu0 0
    %163 = vmatprep.subr.bf16.mxu0 0
    %164 = vmatpush2.bf16.msra.mxu0 0
    %165 = vmatprep.subr.bf16.mxu0 0
    %166 = vmatpush2.bf16.msra.mxu0 0
    %167 = vmatprep.mubr.bf16.mxu0 0
    %168 = vmatmul.mubr.bf16.gmra.mxu0 %v133
    %v169 = vpop.f32.mrf.mxu0
    %v170 = vadd.f32 %v123, %v169
    %v171 = vpop.f32.mrf.mxu0
    %v172 = vpop.f32.mrf.mxu0
    %v173 = vadd.f32 %v123, %v172
    %v174 = vpop.f32.mrf.mxu0
    %175 = vdwg.mxu0
    %v176 = vpack.c.bf16 %v173, %v170
    %v178 = vunpack.c.l.b16 %v176
    %v179 = vunpack.c.h.b16 %v176
    %v180 = vpack.c.b16 %v178, %v178
    %v181 = vpack.c.b16 %v179, %v179
    %vm184 = vcmask 125952
    %185 = vst.msk [vmem:[#allocation7] sm:$0xf] %vm184, %v180
    %186 = vst.msk [vmem:[#allocation7 + $0x4] sm:$0xf] %vm184, %v181
    %v187 = vlaneseq
    %v188 = vand.u32 %v187, 127
    %v189 = vlaneseq
    %v190 = vshrl.u32 %v189, 7
    %v191 = vadd.s32 %v190, 8
    %s192 = smul.u32 0, 16
    %v193 = vstv %s192
    %v194 = vadd.s32 %v190, %v193
    %v195 = vadd.s32 %v191, %v193
    %v196 = vmul.u32 %v194, 16
    %v197 = vmul.u32 %v195, 16
    %v198 = vadd.s32 %v196, %v188
    %v199 = vadd.s32 %v197, %v188
    %s200 = sld [smem:[#allocation3]]
    %v201 = vstv %s200
    %v202 = vxor.u32 %v198, %v201
    %v203 = vxor.u32 %v199, %v201
    %v204 = vshra.s32 %v202, 16
    %v205 = vshra.s32 %v203, 16
    %v206 = vxor.u32 %v202, %v204
    %v207 = vxor.u32 %v203, %v205
    %v208 = vmul.u32 %v206, 2146121005
    %v209 = vmul.u32 %v207, 2146121005
    %v210 = vshra.s32 %v208, 15
    %v211 = vshra.s32 %v209, 15
    %v212 = vxor.u32 %v208, %v210
    %v213 = vxor.u32 %v209, %v211
    %v214 = vmul.u32 %v212, 2221713035
    %v215 = vmul.u32 %v213, 2221713035
    %v216 = vshra.s32 %v214, 16
    %v217 = vshra.s32 %v215, 16
    %v218 = vxor.u32 %v214, %v216
    %v219 = vxor.u32 %v215, %v217
    %v220 = vshra.s32 %v218, 9
    %v221 = vshra.s32 %v219, 9
    %v222 = vand.u32 %v220, 8388607
    %v223 = vand.u32 %v221, 8388607
    %v224 = vcvt.s32.f32 %v222
    %v225 = vcvt.s32.f32 %v223
    %v226 = vmul.f32 %v224, 1.1920929e-07
    %v227 = vmul.f32 %v225, 1.1920929e-07
    %v228 = vadd.f32 %v226, 1e-20
    %v229 = vadd.f32 %v227, 1e-20
    %v230 = vlog2.pop %v228
    %v231 = vmul.f32 %v230, 0.6931472
    %v232 = vlog2.pop %v229
    %v233 = vmul.f32 %v232, 0.6931472
    %v234 = vsub.f32 0.0, %v231
    %v235 = vsub.f32 0.0, %v233
    %v236 = vadd.f32 %v234, 1e-20
    %v237 = vadd.f32 %v235, 1e-20
    %v238 = vlog2.pop %v236
    %v239 = vmul.f32 %v238, 0.6931472
    %v240 = vlog2.pop %v237
    %v241 = vmul.f32 %v240, 0.6931472
    %v242 = vsub.f32 0.0, %v239
    %v243 = vsub.f32 0.0, %v241
    %v244 = vadd.f32 %v170, %v242
    %v245 = vadd.f32 %v173, %v243
    %v246 = vsel %vm131, %v244, -inf
    %247 = vmax.xlane.f32.xlu0 %v246
    %v248 = vpop.xlane.xlu0 %247
    %v249 = vsel %vm131, %v245, -inf
    %250 = vmax.xlane.f32.xlu0 %v249
    %v251 = vpop.xlane.xlu0 %250
    %vm252 = vcmp.eq.f32.partialorder %v244, %v248
    %vm253 = vcmp.eq.f32.partialorder %v245, %v251
    %v254 = vsel %vm252, %v188, 16
    %v255 = vsel %vm253, %v188, 16
    %v256 = vsel %vm131, %v254, 2147483647
    %v257 = vand.u32 %v256, 65535
    %v258 = vshra.s32 %v256, 16
    %v259 = vcvt.s32.f32 %v257
    %v260 = vcvt.s32.f32 %v258
    %261 = vmin.xlane.f32.xlu0 %v260
    %v262 = vpop.xlane.xlu0 %261
    %vm263 = vcmp.eq.f32.partialorder %v260, %v262
    %v264 = vsel %vm263, %v259, inf
    %265 = vmin.xlane.f32.xlu0 %v264
    %v266 = vpop.xlane.xlu0 %265
    %v267 = vcvt.f32.s32 %v266
    %v268 = vcvt.f32.s32 %v262
    %v269 = vshll.u32 %v268, 16
    %v270 = vadd.s32 %v269, %v267
    %v271 = vsel %vm131, %v255, 2147483647
    %v272 = vand.u32 %v271, 65535
    %v273 = vshra.s32 %v271, 16
    %v274 = vcvt.s32.f32 %v272
    %v275 = vcvt.s32.f32 %v273
    %276 = vmin.xlane.f32.xlu0 %v275
    %v277 = vpop.xlane.xlu0 %276
    %vm278 = vcmp.eq.f32.partialorder %v275, %v277
    %v279 = vsel %vm278, %v274, inf
    %280 = vmin.xlane.f32.xlu0 %v279
    %v281 = vpop.xlane.xlu0 %280
    %v282 = vcvt.f32.s32 %v281
    %v283 = vcvt.f32.s32 %v277
    %v284 = vshll.u32 %v283, 16
    %v285 = vadd.s32 %v284, %v282
    %vm286 = vcmp.eq.s32.totalorder %v188, %v270
    %vm287 = vcmp.eq.s32.totalorder %v188, %v285
    %v288 = vsel %vm286, 1.0, 0.0
    %v289 = vsel %vm287, 1.0, 0.0
    %v290 = vpack.c.bf16 %v289, %v288
    %v291 = vld [vmem:[%s6] sm:$0xf]
    %v292 = vld [vmem:[%s6 + $0x4] sm:$0xf]
    %v295 = vunpack.c.l.b16 %v291
    %v296 = vunpack.c.l.b16 %v292
    %v297 = vpack.c.b16 %v296, %v295
    %v300 = vsel %vm131, %v290, 0
    %302 = vmatprep.subr.bf16.mxu0 0
    %303 = vmatpush1.bf16.msra.mxu0 0
    %304 = vmatprep.subr.bf16.mxu0 0
    %305 = vmatpush1.bf16.msra.mxu0 0
    %306 = vmatprep.subr.bf16.mxu0 0
    %307 = vmatpush1.bf16.msra.mxu0 0
    %308 = vmatprep.subr.bf16.mxu0 0
    %309 = vmatpush1.bf16.msra.mxu0 0
    %310 = vmatprep.subr.bf16.mxu0 0
    %311 = vmatpush1.bf16.msra.mxu0 0
    %312 = vmatprep.subr.bf16.mxu0 0
    %313 = vmatpush1.bf16.msra.mxu0 0
    %314 = vmatprep.subr.bf16.mxu0 0
    %315 = vmatpush1.bf16.msra.mxu0 0
    %316 = vmatprep.subr.bf16.mxu0 0
    %317 = vmatpush1.bf16.msra.mxu0 %v297
    %318 = vmatprep.subr.bf16.mxu0 0
    %319 = vmatpush2.bf16.msra.mxu0 0
    %320 = vmatprep.subr.bf16.mxu0 0
    %321 = vmatpush2.bf16.msra.mxu0 0
    %322 = vmatprep.subr.bf16.mxu0 0
    %323 = vmatpush2.bf16.msra.mxu0 0
    %324 = vmatprep.subr.bf16.mxu0 0
    %325 = vmatpush2.bf16.msra.mxu0 0
    %326 = vmatprep.subr.bf16.mxu0 0
    %327 = vmatpush2.bf16.msra.mxu0 0
    %328 = vmatprep.subr.bf16.mxu0 0
    %329 = vmatpush2.bf16.msra.mxu0 0
    %330 = vmatprep.subr.bf16.mxu0 0
    %331 = vmatpush2.bf16.msra.mxu0 0
    %332 = vmatprep.subr.bf16.mxu0 0
    %333 = vmatpush2.bf16.msra.mxu0 0
    %334 = vmatprep.mubr.bf16.mxu0 0
    %335 = vmatmul.mubr.bf16.gmra.mxu0 %v300
    %v336 = vpop.f32.mrf.mxu0
    %v337 = vadd.f32 0.0, %v336
    %v338 = vpop.f32.mrf.mxu0
    %v339 = vpop.f32.mrf.mxu0
    %v340 = vadd.f32 0.0, %v339
    %v341 = vpop.f32.mrf.mxu0
    %342 = vdwg.mxu0
    %v343 = vpack.c.bf16 %v340, %v337
    %v345 = vunpack.c.l.b16 %v343
    %v346 = vunpack.c.h.b16 %v343
    %v347 = vpack.c.b16 %v345, %v345
    %v348 = vpack.c.b16 %v346, %v346
    %vm351 = vcmask 257024
    %352 = vst.msk [vmem:[#allocation8] sm:$0xf] %vm351, %v347
    %353 = vst.msk [vmem:[#allocation8 + $0x4] sm:$0xf] %vm351, %v348
    // Predicated region
    $region30: #{tpu_custom_call.1} parent=1 // pred_check
      _
    $region31: #{tpu_custom_call.1} parent=1 // pred_check_branch
      %355 = sbr.rel (0) target = $region33
    $region32: #{tpu_custom_call.1} parent=1 // pred_region
      %s357 = ssub.s32 128, 128
      %358 = vsyncadd [#allocation6], %s357
      %s359 = sshll.u32 [#allocation7], 4
      %s360 = int_to_ptr.vmem [resolvable:$true] %s359
      %365 = dma.vmem_to_hbm [thread:$0]  %s360, 128, %s7, [#allocation6], 64, 64, 4
    $region33: #{tpu_custom_call.1} parent=1 // pred_fallthru
      _
    // Predicated region
    $region34: #{tpu_custom_call.1} parent=1 // pred_check
      _
    $region35: #{tpu_custom_call.1} parent=1 // pred_check_branch
      %367 = sbr.rel (0) target = $region37
    $region36: #{tpu_custom_call.1} parent=1 // pred_region
      %s369 = ssub.s32 128, 128
      %370 = vsyncadd [#allocation9], %s369
      %s371 = sshll.u32 [#allocation8], 4
      %s372 = int_to_ptr.vmem [resolvable:$true] %s371
      %377 = dma.vmem_to_hbm [thread:$0]  %s372, 128, %s8, [#allocation9], 64, 64, 4
    $region37: #{tpu_custom_call.1} parent=1 // pred_fallthru
      _
    // Predicated region
    $region38: #{tpu_custom_call.1} parent=1 // pred_check
      _
    $region39: #{tpu_custom_call.1} parent=1 // pred_check_branch
      %379 = sbr.rel (0) target = $region41
    $region40: #{tpu_custom_call.1} parent=1 // pred_region
      %380 = dma.done [#allocation6], 128
    $region41: #{tpu_custom_call.1} parent=1 // pred_fallthru
      _
    // Predicated region
    $region42: #{tpu_custom_call.1} parent=1 // pred_check
      _
    $region43: #{tpu_custom_call.1} parent=1 // pred_check_branch
      %382 = sbr.rel (0) target = $region45
    $region44: #{tpu_custom_call.1} parent=1 // pred_region
      %383 = dma.done [#allocation9], 128
    $region45: #{tpu_custom_call.1} parent=1 // pred_fallthru
      _
    %384 = vsyncpa [#allocation5], 1
    %385 = vsyncpa [#allocation6], 1
    %386 = vsyncpa [#allocation9], 1

</llo_original>
